<compile_context>
chip_gen: v7x
topology: tpu7x:2x2x1
jax: 0.10.0
libtpu: 0.0.40
codegen_flags: <defaults>
</compile_context>

<pallas_src>
import functools
import math

import jax
import jax.numpy as jnp
from jax import lax
from jax.experimental import pallas as pl
from jax.experimental.pallas import tpu as pltpu

_INV_SQRT2 = 1.0 / math.sqrt(2.0)
_SQRT_2_OVER_PI = math.sqrt(2.0 / math.pi)


def _round_up(x, m):
    return ((x + m - 1) // m) * m


def _supports_single_buffering():
    if not hasattr(pl, "Buffered"):
        return False
    try:
        pl.BlockSpec((8, 128), lambda i: (i, 0), pipeline_mode=pl.Buffered(1))
        return True
    except Exception:
        return False


_HAS_BUFFERED = _supports_single_buffering()


def _default_vmem_limit():
    # 3/4 of per-core physical VMEM (96 MiB on v5e/v6e, 48 MiB on v7x); falls
    # back to the conservative v7x figure if the hardware query is unavailable.
    try:
        cap = int(pltpu.get_tpu_info().vmem_capacity_bytes)
    except Exception:
        cap = 64 * 1024 * 1024
    return min(max((cap * 3) // 4, 32 * 1024 * 1024), 96 * 1024 * 1024)


def _gelu_f32(g, approximate):
    if approximate:
        # tanh approximation -> transcendental lands on the (otherwise idle) EUP.
        return 0.5 * g * (1.0 + jnp.tanh(_SQRT_2_OVER_PI * (g + 0.044715 * g * g * g)))
    # Exact erf GELU, matching torch.nn.functional.gelu default.
    return 0.5 * g * (1.0 + lax.erf(g * _INV_SQRT2))


def _geglu_kernel(x_ref, wh_ref, wg_ref, bh_ref, bg_ref, o_ref, *, approximate):
    x = x_ref[...]                                                # (tm, dim_in)
    # Two MXU matmuls sharing the same LHS tile; f32 accumulation.
    h = jnp.dot(x, wh_ref[...], preferred_element_type=jnp.float32)
    g = jnp.dot(x, wg_ref[...], preferred_element_type=jnp.float32)
    h = h + bh_ref[...].astype(jnp.float32)                       # (1, tn) bcast
    g = g + bg_ref[...].astype(jnp.float32)
    o_ref[...] = (h * _gelu_f32(g, approximate)).astype(o_ref.dtype)


def _geglu_kernel_ktiled(x_ref, wh_ref, wg_ref, bh_ref, bg_ref, o_ref,
                         acc_h_ref, acc_g_ref, *, approximate):
    k = pl.program_id(2)

    @pl.when(k == 0)
    def _():
        acc_h_ref[...] = jnp.zeros_like(acc_h_ref)
        acc_g_ref[...] = jnp.zeros_like(acc_g_ref)

    x = x_ref[...]                                                # (tm, tk)
    acc_h_ref[...] += jnp.dot(x, wh_ref[...], preferred_element_type=jnp.float32)
    acc_g_ref[...] += jnp.dot(x, wg_ref[...], preferred_element_type=jnp.float32)

    @pl.when(k == pl.num_programs(2) - 1)
    def _():
        h = acc_h_ref[...] + bh_ref[...].astype(jnp.float32)
        g = acc_g_ref[...] + bg_ref[...].astype(jnp.float32)
        o_ref[...] = (h * _gelu_f32(g, approximate)).astype(o_ref.dtype)


def geglu(hidden_states, weight, bias=None, *,
          matmul_dtype=None, approximate_gelu=False,
          tm=None, tn=None, tk=None, vmem_limit_bytes=None):
    """GEGLU forward.

    hidden_states: (..., dim_in)
    weight:        (dim_in, 2*dim_out)   (transpose of torch Linear.weight)
    bias:          (2*dim_out,) or None
    matmul_dtype:  optional MXU operand dtype (e.g. jnp.bfloat16); accumulation
                   stays f32.  Default None keeps input dtype (torch parity).
    returns:       (..., dim_out) in hidden_states.dtype
    """
    *lead, dim_in = hidden_states.shape
    two_dout = weight.shape[1]
    dim_out = two_dout // 2
    out_dtype = hidden_states.dtype

    x = hidden_states.reshape(-1, dim_in)
    if matmul_dtype is not None:
        x = x.astype(matmul_dtype)
        weight = weight.astype(matmul_dtype)
    if bias is None:
        bias = jnp.zeros((two_dout,), jnp.float32)
    M = x.shape[0]

    x_item = jnp.dtype(x.dtype).itemsize
    w_item = jnp.dtype(weight.dtype).itemsize
    out_item = jnp.dtype(out_dtype).itemsize

    # ---- VMEM budget (generation-aware, ~25% headroom for compiler scratch). --
    if vmem_limit_bytes is None:
        vmem_limit_bytes = _default_vmem_limit()
    vmem_limit_bytes = int(vmem_limit_bytes)
    budget = (vmem_limit_bytes * 3) // 4

    # ---- M tile: dtype-aware sublane rounding (8 f32 / 16 bf16 / 32 int8). ----
    sublane = max(8, 32 // x_item)
    if tm is None:
        tm = 512 if vmem_limit_bytes >= 64 * 1024 * 1024 else 256
    tm_eff = _round_up(min(M, tm), sublane)
    M_pad = _round_up(M, tm_eff)

    # ---- K (dim_in) tile: only tiled when the x tile would eat the budget. ----
    if tk is None:
        if 2 * tm_eff * dim_in * x_item <= budget // 3:
            tk = dim_in
        else:
            tk = (budget // 3) // (2 * tm_eff * x_item)
    if tk >= dim_in:
        tk = dim_in
        dim_in_p = dim_in
    else:
        tk = max(128, (int(tk) // 128) * 128)
        dim_in_p = _round_up(dim_in, tk)
    nk = dim_in_p // tk

    # Weight/bias blocks can be single-buffered when their block index is
    # constant over the inner (M) loop -- halves their VMEM footprint (v7x win).
    single_buf_w = _HAS_BUFFERED and nk == 1
    wbuf = 1 if single_buf_w else 2

    # ---- N tile over dim_out: lane-dense 128-multiple sized from the budget,
    #      counting weight + out + bias tiles and the f32 intermediates. --------
    dim_out_128 = _round_up(dim_out, 128)
    if tn is None:
        per_tn = (wbuf * 2 * tk * w_item          # Wh + Wg tiles
                  + 2 * tm_eff * out_item         # double-buffered output tile
                  + 4 * tm_eff * 4                # f32 h/g accumulators & temps
                  + wbuf * 2 * w_item)            # bias tiles
        avail = budget - 2 * tm_eff * tk * x_item
        tn = max(128, (avail // max(per_tn, 1)) // 128 * 128)
    else:
        tn = max(128, _round_up(int(tn), 128))
    tn = min(tn, dim_out_128)
    if dim_out % tn != 0:
        # Prefer the largest 128-multiple divisor (keeps the no-copy weight
        # path) if it is within 2x of the budget-derived tn; otherwise pad N.
        best = 0
        d = 128
        while d <= tn:
            if dim_out % d == 0:
                best = d
            d += 128
        if best * 2 >= tn:
            tn = best
    dim_out_p = _round_up(dim_out, tn)
    n_blocks = dim_out_p // tn
    no_copy = dim_out_p == dim_out   # both halves block-indexed from the unsplit weight

    # ---- Degenerate 1x1 grid: split M so both TensorCores (v7x) get work. -----
    if n_blocks == 1 and M_pad == tm_eff and M_pad >= 2 * sublane:
        tm_eff = _round_up((M_pad + 1) // 2, sublane)
        M_pad = _round_up(M, tm_eff)

    # ---- Materialize (padded) operands. ----------------------------------------
    if M_pad != M or dim_in_p != dim_in:
        x = jnp.pad(x, ((0, M_pad - M), (0, dim_in_p - dim_in)))
    if no_copy:
        if dim_in_p != dim_in:
            weight = jnp.pad(weight, ((0, dim_in_p - dim_in), (0, 0)))
        w_h = w_g = weight                       # same HBM buffer, two block views
        b_h = b_g = bias.reshape(1, two_dout)
    else:
        pad_k = dim_in_p - dim_in
        pad_n = dim_out_p - dim_out
        w_h = jnp.pad(weight[:, :dim_out], ((0, pad_k), (0, pad_n)))
        w_g = jnp.pad(weight[:, dim_out:two_dout], ((0, pad_k), (0, pad_n)))
        b_h = jnp.pad(bias[:dim_out], (0, pad_n)).reshape(1, dim_out_p)
        b_g = jnp.pad(bias[dim_out:two_dout], (0, pad_n)).reshape(1, dim_out_p)

    # ---- Grid, index maps, kernel variant.  Grid ordered (n, m[, k]) so the
    #      weight block index is constant over the inner M loop (stays resident).
    if nk == 1:
        grid = (n_blocks, M_pad // tm_eff)
        dims = ("parallel", "parallel")
        x_spec = pl.BlockSpec((tm_eff, dim_in_p), lambda j, i: (i, 0))
        out_spec = pl.BlockSpec((tm_eff, tn), lambda j, i: (i, j))
        if no_copy:
            wh_map = lambda j, i: (0, j)
            wg_map = lambda j, i: (0, j + n_blocks)
        else:
            wh_map = lambda j, i: (0, j)
            wg_map = lambda j, i: (0, j)
        bh_map, bg_map = wh_map, wg_map
        w_block = (dim_in_p, tn)
        scratch = []
        kernel = functools.partial(_geglu_kernel, approximate=approximate_gelu)
    else:
        grid = (n_blocks, M_pad // tm_eff, nk)
        dims = ("parallel", "parallel", "arbitrary")
        x_spec = pl.BlockSpec((tm_eff, tk), lambda j, i, k: (i, k))
        out_spec = pl.BlockSpec((tm_eff, tn), lambda j, i, k: (i, j))
        if no_copy:
            wh_map = lambda j, i, k: (k, j)
            wg_map = lambda j, i, k: (k, j + n_blocks)
            bh_map = lambda j, i, k: (0, j)
            bg_map = lambda j, i, k: (0, j + n_blocks)
        else:
            wh_map = wg_map = lambda j, i, k: (k, j)
            bh_map = bg_map = lambda j, i, k: (0, j)
        w_block = (tk, tn)
        scratch = [pltpu.VMEM((tm_eff, tn), jnp.float32),
                   pltpu.VMEM((tm_eff, tn), jnp.float32)]
        kernel = functools.partial(_geglu_kernel_ktiled, approximate=approximate_gelu)

    cost = pl.CostEstimate(
        flops=4 * M * dim_in * dim_out,
        transcendentals=M * dim_out,
        bytes_accessed=(M * dim_in * x_item + dim_in * two_dout * w_item
                        + two_dout * jnp.dtype(bias.dtype).itemsize
                        + M * dim_out * out_item),
    )

    def _spec(shape, index_map, single_buffer):
        if single_buffer:
            try:
                return pl.BlockSpec(shape, index_map, pipeline_mode=pl.Buffered(1))
            except TypeError:
                pass
        return pl.BlockSpec(shape, index_map)

    def _run(use_single_buffer):
        in_specs = [
            x_spec,
            _spec(w_block, wh_map, use_single_buffer),
            _spec(w_block, wg_map, use_single_buffer),
            _spec((1, tn), bh_map, use_single_buffer),
            _spec((1, tn), bg_map, use_single_buffer),
        ]
        return pl.pallas_call(
            kernel,
            out_shape=jax.ShapeDtypeStruct((M_pad, dim_out_p), out_dtype),
            grid_spec=pltpu.PrefetchScalarGridSpec(
                num_scalar_prefetch=0,
                grid=grid,
                in_specs=in_specs,
                out_specs=out_spec,
                scratch_shapes=scratch,
            ),
            compiler_params=pltpu.CompilerParams(
                dimension_semantics=dims,
                vmem_limit_bytes=vmem_limit_bytes,
            ),
            cost_estimate=cost,
        )(x, w_h, w_g, b_h, b_g)

    if single_buf_w:
        try:
            out = _run(True)
        except Exception:   # Pallas without Buffered(1) lowering -> double-buffer
            out = _run(False)
    else:
        out = _run(False)

    if M_pad != M or dim_out_p != dim_out:
        out = out[:M, :dim_out]
    return out.reshape(*lead, dim_out)


def _reference(hidden_states, weight, bias):
    proj = jnp.dot(hidden_states, weight) + bias
    h, g = jnp.split(proj, 2, axis=-1)
    return h * jax.nn.gelu(g, approximate=False)


def _make_inputs(key, batch, seq, dim_in, dim_out, dtype=jnp.float32):
    kx, kw, kb = jax.random.split(key, 3)
    x = jax.random.normal(kx, (batch, seq, dim_in), dtype=dtype)
    bound = 1.0 / math.sqrt(dim_in)  # nn.Linear default init range
    weight = jax.random.uniform(kw, (dim_in, dim_out * 2), dtype, -bound, bound)
    bias = jax.random.uniform(kb, (dim_out * 2,), dtype, -bound, bound)
    return x, weight, bias


if __name__ == "__main__":
    key = jax.random.PRNGKey(0)
    k1, k2, k3, k4 = jax.random.split(key, 4)

    # Config 1: small module-implied shapes (non-128-aligned dim_out -> padded-N
    # path; tiny M split into two blocks for the 2-core case).
    x, w, b = _make_inputs(k1, batch=2, seq=8, dim_in=32, dim_out=32)
    out = jax.block_until_ready(geglu(x, w, b))
    ref = _reference(x, w, b)
    assert out.shape == (2, 8, 32)
    assert jnp.allclose(out, ref, atol=1e-4, rtol=1e-4), "mismatch (config 1)"

    # Config 2: 128-aligned dims with forced tn=128 -> zero-copy N-tiled path
    # (block-offset views into the unsplit weight) plus a non-divisible M.
    x2, w2, b2 = _make_inputs(k2, batch=2, seq=65, dim_in=128, dim_out=256)
    out2 = jax.block_until_ready(geglu(x2, w2, b2, tn=128))
    ref2 = _reference(x2, w2, b2)
    assert out2.shape == (2, 65, 256)
    assert jnp.allclose(out2, ref2, atol=1e-4, rtol=1e-4), "mismatch (config 2)"

    # Config 3: forced K tiling (tk=128) with non-128-multiple dim_in (K padding)
    # and non-128-multiple dim_out (N padding) -> accumulator kernel path.
    x3, w3, b3 = _make_inputs(k3, batch=2, seq=48, dim_in=192, dim_out=192)
    out3 = jax.block_until_ready(geglu(x3, w3, b3, tk=128))
    ref3 = _reference(x3, w3, b3)
    assert out3.shape == (2, 48, 192)
    assert jnp.allclose(out3, ref3, atol=1e-4, rtol=1e-4), "mismatch (config 3)"

    # Config 4: bf16 MXU operands (the big perf lever on v6e/v7x); reference
    # computed with bf16-rounded operands, f32 accumulation in both.
    x4, w4, b4 = _make_inputs(k4, batch=2, seq=64, dim_in=128, dim_out=128)
    out4 = jax.block_until_ready(geglu(x4, w4, b4, matmul_dtype=jnp.bfloat16))
    ref4 = _reference(x4.astype(jnp.bfloat16).astype(jnp.float32),
                      w4.astype(jnp.bfloat16).astype(jnp.float32), b4)
    assert out4.shape == (2, 64, 128)
    assert jnp.allclose(out4, ref4, atol=2e-2, rtol=2e-2), "mismatch (config 4)"

    print("KERNEL_OK")
</pallas_src>

<mosaic_0001>
module attributes {stable_mosaic.version = 11 : i64} {
  func.func @_geglu_kernel(%arg0: i32, %arg1: i32, %arg2: memref<8x32xf32, #tpu.memory_space<vmem>>, %arg3: memref<32x128xf32, #tpu.memory_space<vmem>>, %arg4: memref<32x128xf32, #tpu.memory_space<vmem>>, %arg5: memref<1x128xf32, #tpu.memory_space<vmem>>, %arg6: memref<1x128xf32, #tpu.memory_space<vmem>>, %arg7: memref<8x128xf32, #tpu.memory_space<vmem>>) attributes {dimension_semantics = [#tpu.dimension_semantics<parallel>, #tpu.dimension_semantics<parallel>], iteration_bounds = array<i64: 1, 2>, scalar_prefetch = 0 : i64, scratch_operands = 0 : i64, tpu.core_type = #tpu.core_type<tc>, window_params = [{transform_indices = @transform_0, window_bounds = array<i64: 8, 32>}, {pipeline_mode = #tpu.pipeline_mode<synchronous>, transform_indices = @transform_1, window_bounds = array<i64: 32, 128>}, {pipeline_mode = #tpu.pipeline_mode<synchronous>, transform_indices = @transform_2, window_bounds = array<i64: 32, 128>}, {pipeline_mode = #tpu.pipeline_mode<synchronous>, transform_indices = @transform_3, window_bounds = array<i64: 1, 128>}, {pipeline_mode = #tpu.pipeline_mode<synchronous>, transform_indices = @transform_4, window_bounds = array<i64: 1, 128>}, {transform_indices = @transform_5, window_bounds = array<i64: 8, 128>}]} {
    %c0 = arith.constant 0 : index
    %c0_0 = arith.constant 0 : index
    %0 = vector.load %arg2[%c0, %c0_0] : memref<8x32xf32, #tpu.memory_space<vmem>>, vector<8x32xf32>
    %c0_1 = arith.constant 0 : index
    %c0_2 = arith.constant 0 : index
    %1 = vector.load %arg3[%c0_1, %c0_2] : memref<32x128xf32, #tpu.memory_space<vmem>>, vector<32x128xf32>
    %cst = arith.constant dense<0.000000e+00> : vector<8x128xf32>
    %2 = tpu.matmul %0, %1, %cst {dimension_numbers = #tpu.dot_dimension_numbers<[1], [0], [0], [1], [0, 0, 1, 1], [], []>} : vector<8x32xf32>, vector<32x128xf32>, vector<8x128xf32> -> vector<8x128xf32>
    %c0_3 = arith.constant 0 : index
    %c0_4 = arith.constant 0 : index
    %3 = vector.load %arg4[%c0_3, %c0_4] : memref<32x128xf32, #tpu.memory_space<vmem>>, vector<32x128xf32>
    %cst_5 = arith.constant dense<0.000000e+00> : vector<8x128xf32>
    %4 = tpu.matmul %0, %3, %cst_5 {dimension_numbers = #tpu.dot_dimension_numbers<[1], [0], [0], [1], [0, 0, 1, 1], [], []>} : vector<8x32xf32>, vector<32x128xf32>, vector<8x128xf32> -> vector<8x128xf32>
    %c0_6 = arith.constant 0 : index
    %c0_7 = arith.constant 0 : index
    %5 = vector.load %arg5[%c0_6, %c0_7] : memref<1x128xf32, #tpu.memory_space<vmem>>, vector<1x128xf32>
    %6 = vector.broadcast %5 : vector<1x128xf32> to vector<8x128xf32>
    %7 = arith.addf %2, %6 : vector<8x128xf32>
    %c0_8 = arith.constant 0 : index
    %c0_9 = arith.constant 0 : index
    %8 = vector.load %arg6[%c0_8, %c0_9] : memref<1x128xf32, #tpu.memory_space<vmem>>, vector<1x128xf32>
    %9 = vector.broadcast %8 : vector<1x128xf32> to vector<8x128xf32>
    %10 = arith.addf %4, %9 : vector<8x128xf32>
    %cst_10 = arith.constant 5.000000e-01 : f32
    %11 = vector.broadcast %cst_10 : f32 to vector<8x128xf32>
    %12 = arith.mulf %11, %10 : vector<8x128xf32>
    %cst_11 = arith.constant 0.707106769 : f32
    %13 = vector.broadcast %cst_11 : f32 to vector<8x128xf32>
    %14 = arith.mulf %10, %13 : vector<8x128xf32>
    %15 = math.erf %14 : vector<8x128xf32>
    %cst_12 = arith.constant 1.000000e+00 : f32
    %16 = vector.broadcast %cst_12 : f32 to vector<8x128xf32>
    %17 = arith.addf %16, %15 : vector<8x128xf32>
    %18 = arith.mulf %12, %17 : vector<8x128xf32>
    %19 = arith.mulf %7, %18 : vector<8x128xf32>
    %c0_13 = arith.constant 0 : index
    %c0_14 = arith.constant 0 : index
    %20 = vector.load %arg7[%c0_13, %c0_14] : memref<8x128xf32, #tpu.memory_space<vmem>>, vector<8x128xf32>
    tpu.vector_store %arg7[%c0_13, %c0_14], %19 {strides = array<i32>} : memref<8x128xf32, #tpu.memory_space<vmem>>, vector<8x128xf32>,
    return
  }
  func.func @transform_0(%arg0: i32, %arg1: i32) -> (i32, i32) {
    %c0_i32 = arith.constant 0 : i32
    %c0_i32_0 = arith.constant 0 : i32
    return %arg1, %c0_i32 : i32, i32
  }
  func.func @transform_1(%arg0: i32, %arg1: i32) -> (i32, i32) {
    %c0_i32 = arith.constant 0 : i32
    %c0_i32_0 = arith.constant 0 : i32
    return %c0_i32, %arg0 : i32, i32
  }
  func.func @transform_2(%arg0: i32, %arg1: i32) -> (i32, i32) {
    %c0_i32 = arith.constant 0 : i32
    %c0_i32_0 = arith.constant 0 : i32
    return %c0_i32, %arg0 : i32, i32
  }
  func.func @transform_3(%arg0: i32, %arg1: i32) -> (i32, i32) {
    %c0_i32 = arith.constant 0 : i32
    %c0_i32_0 = arith.constant 0 : i32
    return %c0_i32, %arg0 : i32, i32
  }
  func.func @transform_4(%arg0: i32, %arg1: i32) -> (i32, i32) {
    %c0_i32 = arith.constant 0 : i32
    %c0_i32_0 = arith.constant 0 : i32
    return %c0_i32, %arg0 : i32, i32
  }
  func.func @transform_5(%arg0: i32, %arg1: i32) -> (i32, i32) {
    %c0_i32 = arith.constant 0 : i32
    return %arg1, %arg0 : i32, i32
  }
}

module attributes {stable_mosaic.version = 11 : i64} {
  func.func @_geglu_kernel(%arg0: i32, %arg1: i32, %arg2: memref<8x32xf32, #tpu.memory_space<vmem>>, %arg3: memref<32x128xf32, #tpu.memory_space<vmem>>, %arg4: memref<32x128xf32, #tpu.memory_space<vmem>>, %arg5: memref<1x128xf32, #tpu.memory_space<vmem>>, %arg6: memref<1x128xf32, #tpu.memory_space<vmem>>, %arg7: memref<8x128xf32, #tpu.memory_space<vmem>>) attributes {dimension_semantics = [#tpu.dimension_semantics<parallel>, #tpu.dimension_semantics<parallel>], iteration_bounds = array<i64: 1, 2>, scalar_prefetch = 0 : i64, scratch_operands = 0 : i64, tpu.core_type = #tpu.core_type<tc>, window_params = [{transform_indices = @transform_0, window_bounds = array<i64: 8, 32>}, {transform_indices = @transform_1, window_bounds = array<i64: 32, 128>}, {transform_indices = @transform_2, window_bounds = array<i64: 32, 128>}, {transform_indices = @transform_3, window_bounds = array<i64: 1, 128>}, {transform_indices = @transform_4, window_bounds = array<i64: 1, 128>}, {transform_indices = @transform_5, window_bounds = array<i64: 8, 128>}]} {
    %c0 = arith.constant 0 : index
    %c0_0 = arith.constant 0 : index
    %0 = vector.load %arg2[%c0, %c0_0] : memref<8x32xf32, #tpu.memory_space<vmem>>, vector<8x32xf32>
    %c0_1 = arith.constant 0 : index
    %c0_2 = arith.constant 0 : index
    %1 = vector.load %arg3[%c0_1, %c0_2] : memref<32x128xf32, #tpu.memory_space<vmem>>, vector<32x128xf32>
    %cst = arith.constant dense<0.000000e+00> : vector<8x128xf32>
    %2 = tpu.matmul %0, %1, %cst {dimension_numbers = #tpu.dot_dimension_numbers<[1], [0], [0], [1], [0, 0, 1, 1], [], []>} : vector<8x32xf32>, vector<32x128xf32>, vector<8x128xf32> -> vector<8x128xf32>
    %c0_3 = arith.constant 0 : index
    %c0_4 = arith.constant 0 : index
    %3 = vector.load %arg4[%c0_3, %c0_4] : memref<32x128xf32, #tpu.memory_space<vmem>>, vector<32x128xf32>
    %cst_5 = arith.constant dense<0.000000e+00> : vector<8x128xf32>
    %4 = tpu.matmul %0, %3, %cst_5 {dimension_numbers = #tpu.dot_dimension_numbers<[1], [0], [0], [1], [0, 0, 1, 1], [], []>} : vector<8x32xf32>, vector<32x128xf32>, vector<8x128xf32> -> vector<8x128xf32>
    %c0_6 = arith.constant 0 : index
    %c0_7 = arith.constant 0 : index
    %5 = vector.load %arg5[%c0_6, %c0_7] : memref<1x128xf32, #tpu.memory_space<vmem>>, vector<1x128xf32>
    %6 = vector.broadcast %5 : vector<1x128xf32> to vector<8x128xf32>
    %7 = arith.addf %2, %6 : vector<8x128xf32>
    %c0_8 = arith.constant 0 : index
    %c0_9 = arith.constant 0 : index
    %8 = vector.load %arg6[%c0_8, %c0_9] : memref<1x128xf32, #tpu.memory_space<vmem>>, vector<1x128xf32>
    %9 = vector.broadcast %8 : vector<1x128xf32> to vector<8x128xf32>
    %10 = arith.addf %4, %9 : vector<8x128xf32>
    %cst_10 = arith.constant 5.000000e-01 : f32
    %11 = vector.broadcast %cst_10 : f32 to vector<8x128xf32>
    %12 = arith.mulf %11, %10 : vector<8x128xf32>
    %cst_11 = arith.constant 0.707106769 : f32
    %13 = vector.broadcast %cst_11 : f32 to vector<8x128xf32>
    %14 = arith.mulf %10, %13 : vector<8x128xf32>
    %15 = math.erf %14 : vector<8x128xf32>
    %cst_12 = arith.constant 1.000000e+00 : f32
    %16 = vector.broadcast %cst_12 : f32 to vector<8x128xf32>
    %17 = arith.addf %16, %15 : vector<8x128xf32>
    %18 = arith.mulf %12, %17 : vector<8x128xf32>
    %19 = arith.mulf %7, %18 : vector<8x128xf32>
    %c0_13 = arith.constant 0 : index
    %c0_14 = arith.constant 0 : index
    %20 = vector.load %arg7[%c0_13, %c0_14] : memref<8x128xf32, #tpu.memory_space<vmem>>, vector<8x128xf32>
    tpu.vector_store %arg7[%c0_13, %c0_14], %19 {strides = array<i32>} : memref<8x128xf32, #tpu.memory_space<vmem>>, vector<8x128xf32>,
    return
  }
  func.func @transform_0(%arg0: i32, %arg1: i32) -> (i32, i32) {
    %c0_i32 = arith.constant 0 : i32
    %c0_i32_0 = arith.constant 0 : i32
    return %arg1, %c0_i32 : i32, i32
  }
  func.func @transform_1(%arg0: i32, %arg1: i32) -> (i32, i32) {
    %c0_i32 = arith.constant 0 : i32
    %c0_i32_0 = arith.constant 0 : i32
    return %c0_i32, %arg0 : i32, i32
  }
  func.func @transform_2(%arg0: i32, %arg1: i32) -> (i32, i32) {
    %c0_i32 = arith.constant 0 : i32
    %c0_i32_0 = arith.constant 0 : i32
    return %c0_i32, %arg0 : i32, i32
  }
  func.func @transform_3(%arg0: i32, %arg1: i32) -> (i32, i32) {
    %c0_i32 = arith.constant 0 : i32
    %c0_i32_0 = arith.constant 0 : i32
    return %c0_i32, %arg0 : i32, i32
  }
  func.func @transform_4(%arg0: i32, %arg1: i32) -> (i32, i32) {
    %c0_i32 = arith.constant 0 : i32
    %c0_i32_0 = arith.constant 0 : i32
    return %c0_i32, %arg0 : i32, i32
  }
  func.func @transform_5(%arg0: i32, %arg1: i32) -> (i32, i32) {
    %c0_i32 = arith.constant 0 : i32
    return %arg1, %arg0 : i32, i32
  }
}

</mosaic_0001>

<llo_original>
// kernel: tpu_custom_call.1
$region0: #{tpu_custom_call.1}
  #allocation0 [shape = 'u32[]', space=smem, size = 0x4, offset = 0x4, fixed_abs, tag = 'smem constant byte address 0x4 - core index']
  #allocation1 [shape = 'u32[144,128]{1,0:T(1,128)}', space=vmem, size = 0x12000, scoped, tag = 'internal scratch']
  %s0 = inlined_call_operand.hbm [shape: f32[16,32], index: 0, kind: input, shape index: {}]
  %s1 = inlined_call_operand.hbm [shape: f32[32,128], index: 1, kind: input, shape index: {}]
  %s2 = inlined_call_operand.hbm [shape: f32[32,128], index: 2, kind: input, shape index: {}]
  %s3 = inlined_call_operand.vmem [shape: f32[1,128], index: 3, kind: input, shape index: {}]
  %s4 = inlined_call_operand.vmem [shape: f32[1,128], index: 4, kind: input, shape index: {}]
  %s5 = inlined_call_operand.hbm [shape: f32[16,128], index: 5, kind: output, shape index: {}]
  %s6 = sld [smem:[#allocation0]]
  $region65: #{tpu_custom_call.1} parent=0
    _
  %s8 = ssub.s32 1, %s6
  %s9 = scalar_select 0, %s8, %s6
  $region1: #{tpu_custom_call.1} parent=0
    #allocation2 [shape = 'u8[8192]{0}', space=vmem, size = 0x2000, scoped, tag = 'input window, operand 0']
    #allocation3 [shape = 's32[2]{0}', space=sflag, size = 0x8, scoped, tag = 'scoped memory for tpu_custom_call.1']
    #allocation4 [shape = 's32[2]{0}', space=sflag, size = 0x8, scoped, tag = 'scoped memory for tpu_custom_call.1']
    #allocation5 [shape = 'u8[16384]{0}', space=vmem, size = 0x4000, scoped, tag = 'input window, operand 1, single buffered']
    #allocation6 [shape = 's32[1]{0}', space=sflag, size = 0x4, scoped, tag = 'scoped memory for tpu_custom_call.1']
    #allocation7 [shape = 'u8[16384]{0}', space=vmem, size = 0x4000, scoped, tag = 'input window, operand 2, single buffered']
    #allocation8 [shape = 'u8[8192]{0}', space=vmem, size = 0x2000, scoped, tag = 'output window, operand 0']
    %10 = vsyncpa [#allocation3], 0
    %s11 = scalar_lea.sflag [#allocation3], 1
    %12 = vsyncpa %s11, 0
    %13 = vsyncpa [#allocation6], 0
    %14 = vsyncpa [#allocation4], 0
    %s15 = scalar_lea.sflag [#allocation4], 1
    %16 = vsyncpa %s15, 0
    loop: start=0, step=1, limit=4
    $region2: #{tpu_custom_call.1} parent=1 // loop_pre_header
      _
    $region3: #{tpu_custom_call.1} parent=1 // loop_header
      %s18 = sphi 0, %s22
      %p19 = scmp.ge.s32.totalorder %s18, 4
      %s25 = sphi 0, %s37
      %s26 = sphi 0, %s33
      %s27 = sphi 0, %s25
      %s28 = sphi 0, %s26
      %s29 = sphi 0, %s27
      %s30 = sphi 0, %s28
      %s40 = sphi 0, %s42
      %s43 = sphi 0, %s40
      %s44 = sphi 0, %s43
      %s60 = sphi 0, %s44
      %s66 = sphi 0, %s68
      %s69 = sphi 0, %s66
      %s70 = sphi 0, %s69
      %s86 = sphi 0, %s70
      %s92 = sphi 0, %s94
      %s95 = sphi 0, %s92
      %s96 = sphi 0, %s95
      %s112 = sphi 0, %s96
      %s118 = sphi 0, %s120
      %s121 = sphi 0, %s118
      %s122 = sphi 0, %s121
      %s138 = sphi 0, %s122
      %s144 = sphi 0, %s146
      %s147 = sphi 0, %s144
      %s148 = sphi 0, %s147
      %s164 = sphi 0, %s148
      %s172 = sphi 0, %s174
      %s175 = sphi 0, %s172
      %s176 = sphi 0, %s175
      %s192 = sphi 0, %s176
    $region4: #{tpu_custom_call.1} parent=1 // loop_header_branch
      %21 = sbr.rel (%p19) target = $region8
    $region5: #{tpu_custom_call.1} parent=1 // loop_body
      %s23 = ssub.s32 %s18, 1
      %s24 = ssub.s32 %s18, 2
      %s31 = sadd.s32 1, %s26
      %p32 = scmp.ge.s32.totalorder %s31, 2
      %s33 = scalar_select %p32, 0, %s31
      %s34 = sadd.s32 1, %s25
      %s35 = scalar_select %p32, %s34, %s25
      %p36 = scmp.ge.s32.totalorder %s35, 1
      %s37 = scalar_select %p36, 0, %s35
      %s38 = ssub.s32 %s26, %s33
      %p39 = scmp.eq.s32.totalorder %s38, 0
      %s41 = sadd.s32 %s40, 1
      %s42 = scalar_select %p39, %s40, %s41
      %p45 = pneg %p39
      %p46 = scmp.eq.s32.totalorder %s18, 1
      %p47 = por %p45, %p46
      %p48 = scmp.ne.s32.totalorder %s40, %s43
      %p49 = scmp.eq.s32.totalorder %s18, 0
      %p50 = por %p48, %p49
      %p51 = scmp.ne.s32.totalorder %s40, %s43
      %p52 = scmp.eq.s32.totalorder %s23, 1
      %p53 = por %p51, %p52
      %p54 = scmp.ne.s32.totalorder %s43, %s44
      %p55 = scmp.eq.s32.totalorder %s23, 0
      %p56 = por %p54, %p55
      %p57 = scmp.ne.s32.totalorder %s43, %s44
      %p58 = scmp.eq.s32.totalorder %s24, 1
      %p59 = por %p57, %p58
      %p61 = scmp.ne.s32.totalorder %s44, %s60
      %p62 = scmp.eq.s32.totalorder %s24, 0
      %p63 = por %p61, %p62
      %s64 = ssub.s32 %s25, %s37
      %p65 = scmp.eq.s32.totalorder %s64, 0
      %s67 = sadd.s32 %s66, 1
      %s68 = scalar_select %p65, %s66, %s67
      %p71 = pneg %p65
      %p72 = scmp.eq.s32.totalorder %s18, 1
      %p73 = por %p71, %p72
      %p74 = scmp.ne.s32.totalorder %s66, %s69
      %p75 = scmp.eq.s32.totalorder %s18, 0
      %p76 = por %p74, %p75
      %p77 = scmp.ne.s32.totalorder %s66, %s69
      %p78 = scmp.eq.s32.totalorder %s23, 1
      %p79 = por %p77, %p78
      %p80 = scmp.ne.s32.totalorder %s69, %s70
      %p81 = scmp.eq.s32.totalorder %s23, 0
      %p82 = por %p80, %p81
      %p83 = scmp.ne.s32.totalorder %s69, %s70
      %p84 = scmp.eq.s32.totalorder %s24, 1
      %p85 = por %p83, %p84
      %p87 = scmp.ne.s32.totalorder %s70, %s86
      %p88 = scmp.eq.s32.totalorder %s24, 0
      %p89 = por %p87, %p88
      %s90 = ssub.s32 %s25, %s37
      %p91 = scmp.eq.s32.totalorder %s90, 0
      %s93 = sadd.s32 %s92, 1
      %s94 = scalar_select %p91, %s92, %s93
      %p97 = pneg %p91
      %p98 = scmp.eq.s32.totalorder %s18, 1
      %p99 = por %p97, %p98
      %p100 = scmp.ne.s32.totalorder %s92, %s95
      %p101 = scmp.eq.s32.totalorder %s18, 0
      %p102 = por %p100, %p101
      %p103 = scmp.ne.s32.totalorder %s92, %s95
      %p104 = scmp.eq.s32.totalorder %s23, 1
      %p105 = por %p103, %p104
      %p106 = scmp.ne.s32.totalorder %s95, %s96
      %p107 = scmp.eq.s32.totalorder %s23, 0
      %p108 = por %p106, %p107
      %p109 = scmp.ne.s32.totalorder %s95, %s96
      %p110 = scmp.eq.s32.totalorder %s24, 1
      %p111 = por %p109, %p110
      %p113 = scmp.ne.s32.totalorder %s96, %s112
      %p114 = scmp.eq.s32.totalorder %s24, 0
      %p115 = por %p113, %p114
      %s116 = ssub.s32 %s25, %s37
      %p117 = scmp.eq.s32.totalorder %s116, 0
      %s119 = sadd.s32 %s118, 1
      %s120 = scalar_select %p117, %s118, %s119
      %p123 = pneg %p117
      %p124 = scmp.eq.s32.totalorder %s18, 1
      %p125 = por %p123, %p124
      %p126 = scmp.ne.s32.totalorder %s118, %s121
      %p127 = scmp.eq.s32.totalorder %s18, 0
      %p128 = por %p126, %p127
      %p129 = scmp.ne.s32.totalorder %s118, %s121
      %p130 = scmp.eq.s32.totalorder %s23, 1
      %p131 = por %p129, %p130
      %p132 = scmp.ne.s32.totalorder %s121, %s122
      %p133 = scmp.eq.s32.totalorder %s23, 0
      %p134 = por %p132, %p133
      %p135 = scmp.ne.s32.totalorder %s121, %s122
      %p136 = scmp.eq.s32.totalorder %s24, 1
      %p137 = por %p135, %p136
      %p139 = scmp.ne.s32.totalorder %s122, %s138
      %p140 = scmp.eq.s32.totalorder %s24, 0
      %p141 = por %p139, %p140
      %s142 = ssub.s32 %s25, %s37
      %p143 = scmp.eq.s32.totalorder %s142, 0
      %s145 = sadd.s32 %s144, 1
      %s146 = scalar_select %p143, %s144, %s145
      %p149 = pneg %p143
      %p150 = scmp.eq.s32.totalorder %s18, 1
      %p151 = por %p149, %p150
      %p152 = scmp.ne.s32.totalorder %s144, %s147
      %p153 = scmp.eq.s32.totalorder %s18, 0
      %p154 = por %p152, %p153
      %p155 = scmp.ne.s32.totalorder %s144, %s147
      %p156 = scmp.eq.s32.totalorder %s23, 1
      %p157 = por %p155, %p156
      %p158 = scmp.ne.s32.totalorder %s147, %s148
      %p159 = scmp.eq.s32.totalorder %s23, 0
      %p160 = por %p158, %p159
      %p161 = scmp.ne.s32.totalorder %s147, %s148
      %p162 = scmp.eq.s32.totalorder %s24, 1
      %p163 = por %p161, %p162
      %p165 = scmp.ne.s32.totalorder %s148, %s164
      %p166 = scmp.eq.s32.totalorder %s24, 0
      %p167 = por %p165, %p166
      %s168 = ssub.s32 %s26, %s33
      %s169 = ssub.s32 %s25, %s37
      %s170 = sor.u32 %s168, %s169
      %p171 = scmp.eq.s32.totalorder %s170, 0
      %s173 = sadd.s32 %s172, 1
      %s174 = scalar_select %p171, %s172, %s173
      %p177 = pneg %p171
      %p178 = scmp.eq.s32.totalorder %s18, 1
      %p179 = por %p177, %p178
      %p180 = scmp.ne.s32.totalorder %s172, %s175
      %p181 = scmp.eq.s32.totalorder %s18, 0
      %p182 = por %p180, %p181
      %p183 = scmp.ne.s32.totalorder %s172, %s175
      %p184 = scmp.eq.s32.totalorder %s23, 1
      %p185 = por %p183, %p184
      %p186 = scmp.ne.s32.totalorder %s175, %s176
      %p187 = scmp.eq.s32.totalorder %s23, 0
      %p188 = por %p186, %p187
      %p189 = scmp.ne.s32.totalorder %s175, %s176
      %p190 = scmp.eq.s32.totalorder %s24, 1
      %p191 = por %p189, %p190
      %p193 = scmp.ne.s32.totalorder %s176, %s192
      %p194 = scmp.eq.s32.totalorder %s24, 0
      %p195 = por %p193, %p194
      %p196 = scmp.le.s32.totalorder 1, %s18
      %p197 = scmp.lt.s32.totalorder %s18, 3
      %p198 = pnand %p196, %p197
      %p199 = pneg %p198
      // Predicated region
      $region9: #{tpu_custom_call.1} parent=5 // pred_check
        _
      $region10: #{tpu_custom_call.1} parent=5 // pred_check_branch
        %201 = sbr.rel (%p198) target = $region12
      $region11: #{tpu_custom_call.1} parent=5 // pred_region
        %s202 = ssub.s32 %s18, 1
        // Predicated region
        $region13: #{tpu_custom_call.1} parent=11 // pred_check
          %p203 = pneg %p82
        $region14: #{tpu_custom_call.1} parent=11 // pred_check_branch
          %205 = sbr.rel (%p203) target = $region16
        $region15: #{tpu_custom_call.1} parent=11 // pred_region
          %s207 = ssub.s32 512, 512
          %208 = vsyncadd [#allocation6], %s207
          %s209 = smul.addr %s27, 128
          %s210 = scalar_lea.hbm %s1, %s209
          %s211 = sshll.u32 [#allocation5], 4
          %s212 = int_to_ptr.vmem [resolvable:$true] %s211
          %217 = dma.hbm_to_vmem [thread:$0]  %s210, 512, %s212, [#allocation6], 128, 128, 8
        $region16: #{tpu_custom_call.1} parent=11 // pred_fallthru
          _
        // Predicated region
        $region17: #{tpu_custom_call.1} parent=11 // pred_check
          %p218 = pneg %p108
        $region18: #{tpu_custom_call.1} parent=11 // pred_check_branch
          %220 = sbr.rel (%p218) target = $region20
        $region19: #{tpu_custom_call.1} parent=11 // pred_region
          %s222 = ssub.s32 512, 512
          %223 = vsyncadd [#allocation6], %s222
          %s224 = smul.addr %s27, 128
          %s225 = scalar_lea.hbm %s2, %s224
          %s226 = sshll.u32 [#allocation7], 4
          %s227 = int_to_ptr.vmem [resolvable:$true] %s226
          %232 = dma.hbm_to_vmem [thread:$0]  %s225, 512, %s227, [#allocation6], 128, 128, 8
        $region20: #{tpu_custom_call.1} parent=11 // pred_fallthru
          _
        // Predicated region
        $region21: #{tpu_custom_call.1} parent=11 // pred_check
          %p233 = pneg %p134
        $region22: #{tpu_custom_call.1} parent=11 // pred_check_branch
          %235 = sbr.rel (%p233) target = $region24
        $region23: #{tpu_custom_call.1} parent=11 // pred_region
          %p236 = scmp.lt.s32.totalorder %s27, 0
          %s237 = scalar_select %p236, %s27, 0
          %s238 = scalar_lea.vmem %s3, %s237
        $region24: #{tpu_custom_call.1} parent=11 // pred_fallthru
          _
        // Predicated region
        $region25: #{tpu_custom_call.1} parent=11 // pred_check
          %p239 = pneg %p160
        $region26: #{tpu_custom_call.1} parent=11 // pred_check_branch
          %241 = sbr.rel (%p239) target = $region28
        $region27: #{tpu_custom_call.1} parent=11 // pred_region
          %p242 = scmp.lt.s32.totalorder %s27, 0
          %s243 = scalar_select %p242, %s27, 0
          %s244 = scalar_lea.vmem %s4, %s243
        $region28: #{tpu_custom_call.1} parent=11 // pred_fallthru
          _
      $region12: #{tpu_custom_call.1} parent=5 // pred_fallthru
        _
      %p245 = scmp.lt.s32.totalorder %s18, 2
      // Predicated region
      $region29: #{tpu_custom_call.1} parent=5 // pred_check
        %p246 = pneg %p245
      $region30: #{tpu_custom_call.1} parent=5 // pred_check_branch
        %248 = sbr.rel (%p246) target = $region32
      $region31: #{tpu_custom_call.1} parent=5 // pred_region
        // Predicated region
        $region33: #{tpu_custom_call.1} parent=31 // pred_check
          %p249 = pneg %p50
        $region34: #{tpu_custom_call.1} parent=31 // pred_check_branch
          %251 = sbr.rel (%p249) target = $region36
        $region35: #{tpu_custom_call.1} parent=31 // pred_region
          %s252 = sand.u32 %s40, 1
          %s253 = scalar_lea.sflag [#allocation3], %s252
          %s254 = sand.u32 %s40, 1
          %s255 = smul.addr %s254, 8
          %s256 = scalar_lea.vmem [#allocation2], %s255
          %s258 = ssub.s32 128, 128
          %259 = vsyncadd %s253, %s258
          %s260 = smul.addr %s26, 128
          %s261 = scalar_lea.hbm %s0, %s260
          %s263 = sshll.u32 %s256, 4
          %s264 = int_to_ptr.vmem [resolvable:$true] %s263
          %266 = dma.hbm_to_vmem [thread:$0]  %s261, 128, %s264, %s253
        $region36: #{tpu_custom_call.1} parent=31 // pred_fallthru
          _
      $region32: #{tpu_custom_call.1} parent=5 // pred_fallthru
        _
      %p267 = scmp.le.s32.totalorder 1, %s18
      %p268 = scmp.lt.s32.totalorder %s18, 3
      %p269 = pnand %p267, %p268
      %p270 = pneg %p269
      // Predicated region
      $region37: #{tpu_custom_call.1} parent=5 // pred_check
        _
      $region38: #{tpu_custom_call.1} parent=5 // pred_check_branch
        %272 = sbr.rel (%p269) target = $region40
      $region39: #{tpu_custom_call.1} parent=5 // pred_region
        %s273 = ssub.s32 %s18, 1
        %s274 = sand.u32 %s43, 1
        %s275 = scalar_lea.sflag [#allocation3], %s274
        %s276 = sand.u32 %s43, 1
        %s277 = smul.addr %s276, 8
        %s278 = scalar_lea.vmem [#allocation2], %s277
        // Predicated region
        $region41: #{tpu_custom_call.1} parent=39 // pred_check
          %p279 = pneg %p56
        $region42: #{tpu_custom_call.1} parent=39 // pred_check_branch
          %281 = sbr.rel (%p279) target = $region44
        $region43: #{tpu_custom_call.1} parent=39 // pred_region
          %282 = dma.done %s275, 128
        $region44: #{tpu_custom_call.1} parent=39 // pred_fallthru
          _
        // Predicated region
        $region45: #{tpu_custom_call.1} parent=39 // pred_check
          %p283 = pneg %p82
        $region46: #{tpu_custom_call.1} parent=39 // pred_check_branch
          %285 = sbr.rel (%p283) target = $region48
        $region47: #{tpu_custom_call.1} parent=39 // pred_region
          %286 = dma.done [#allocation6], 512
        $region48: #{tpu_custom_call.1} parent=39 // pred_fallthru
          _
        // Predicated region
        $region49: #{tpu_custom_call.1} parent=39 // pred_check
          %p287 = pneg %p108
        $region50: #{tpu_custom_call.1} parent=39 // pred_check_branch
          %289 = sbr.rel (%p287) target = $region52
        $region51: #{tpu_custom_call.1} parent=39 // pred_region
          %290 = dma.done [#allocation6], 512
        $region52: #{tpu_custom_call.1} parent=39 // pred_fallthru
          _
        %s291 = sand.u32 %s43, 1
        %s292 = scalar_lea.sflag [#allocation3], %s291
        %s293 = sand.u32 %s43, 1
        %s294 = smul.addr %s293, 8
        %s295 = scalar_lea.vmem [#allocation2], %s294
        %p296 = pneg %p56
        %p297 = pneg %p53
        %p298 = pneg %p82
        %p299 = pneg %p79
        %p300 = pneg %p108
        %p301 = pneg %p105
        %p302 = scmp.lt.s32.totalorder %s27, 0
        %s303 = scalar_select %p302, %s27, 0
        %s304 = scalar_lea.vmem %s3, %s303
        %p305 = pneg %p134
        %p306 = pneg %p131
        %p307 = scmp.lt.s32.totalorder %s27, 0
        %s308 = scalar_select %p307, %s27, 0
        %s309 = scalar_lea.vmem %s4, %s308
        %p310 = pneg %p160
        %p311 = pneg %p157
        %p312 = pneg %p188
        %p313 = pneg %p185
        %s314 = sand.u32 %s175, 1
        %s315 = scalar_lea.sflag [#allocation4], %s314
        %s316 = sand.u32 %s175, 1
        %s317 = smul.addr %s316, 8
        %s318 = scalar_lea.vmem [#allocation8], %s317
        %p319 = scmp.lt.s32.totalorder %s27, 0
        %s320 = scalar_select %p319, %s27, 0
        %s321 = scalar_lea.vmem %s3, %s320
        %p322 = scmp.lt.s32.totalorder %s27, 0
        %s323 = scalar_select %p322, %s27, 0
        %s324 = scalar_lea.vmem %s4, %s323
        %v325 = vld [vmem:[%s278] sm:$0xff]
        %v326 = vld [vmem:[#allocation5] sm:$0xff]
        %v327 = vld [vmem:[#allocation5 + $0x8] sm:$0xff]
        %v328 = vld [vmem:[#allocation5 + $0x10] sm:$0xff]
        %v329 = vld [vmem:[#allocation5 + $0x18] sm:$0xff]
        %v330 = vld [vmem:[#allocation7] sm:$0xff]
        %v331 = vld [vmem:[#allocation7 + $0x8] sm:$0xff]
        %v332 = vld [vmem:[#allocation7 + $0x10] sm:$0xff]
        %v333 = vld [vmem:[#allocation7 + $0x18] sm:$0xff]
        %v334 = vld [vmem:[%s321] sm:$0x1]
        %v336 = vlaneseq
        %v337 = vshrl.u32 %v336, 7
        %v338 = vsub.s32 0, %v337
        %v339 = vrot.slane %v334, %v338
        %vm341 = vcmask 261120
        %v343 = vsel %vm341, %v325, 0
        %345 = vmatprep.subr.mxu0 0.0
        %346 = vmatpush1.msra.mxu0 %v326
        %347 = vmatprep.subr.mxu0 0.0
        %348 = vmatpush1.msra.mxu0 %v327
        %349 = vmatprep.subr.mxu0 0.0
        %350 = vmatpush1.msra.mxu0 %v328
        %351 = vmatprep.subr.mxu0 0.0
        %352 = vmatpush1.msra.mxu0 %v329
        %353 = vmatprep.subr.mxu0 0.0
        %354 = vmatpush1.msra.mxu0 0.0
        %355 = vmatprep.subr.mxu0 0.0
        %356 = vmatpush1.msra.mxu0 0.0
        %357 = vmatprep.subr.mxu0 0.0
        %358 = vmatpush1.msra.mxu0 0.0
        %359 = vmatprep.subr.mxu0 0.0
        %360 = vmatpush1.msra.mxu0 0.0
        %361 = vmatprep.subr.mxu0 0.0
        %362 = vmatpush1.msra.mxu0 0.0
        %363 = vmatprep.subr.mxu0 0.0
        %364 = vmatpush1.msra.mxu0 0.0
        %365 = vmatprep.subr.mxu0 0.0
        %366 = vmatpush1.msra.mxu0 0.0
        %367 = vmatprep.subr.mxu0 0.0
        %368 = vmatpush1.msra.mxu0 0.0
        %369 = vmatprep.subr.mxu0 0.0
        %370 = vmatpush1.msra.mxu0 0.0
        %371 = vmatprep.subr.mxu0 0.0
        %372 = vmatpush1.msra.mxu0 0.0
        %373 = vmatprep.subr.mxu0 0.0
        %374 = vmatpush1.msra.mxu0 0.0
        %375 = vmatprep.subr.mxu0 0.0
        %376 = vmatpush1.msra.mxu0 0.0
        %377 = vmatprep.subr.mxu0 0.0
        %378 = vmatpush1.msra.mxu0 0.0
        %379 = vmatprep.subr.mxu0 0.0
        %380 = vmatpush1.msra.mxu0 0.0
        %381 = vmatprep.subr.mxu0 0.0
        %382 = vmatpush1.msra.mxu0 0.0
        %383 = vmatprep.subr.mxu0 0.0
        %384 = vmatpush1.msra.mxu0 0.0
        %385 = vmatprep.subr.mxu0 0.0
        %386 = vmatpush1.msra.mxu0 0.0
        %387 = vmatprep.subr.mxu0 0.0
        %388 = vmatpush1.msra.mxu0 0.0
        %389 = vmatprep.subr.mxu0 0.0
        %390 = vmatpush1.msra.mxu0 0.0
        %391 = vmatprep.subr.mxu0 0.0
        %392 = vmatpush1.msra.mxu0 0.0
        %393 = vmatprep.subr.mxu0 0.0
        %394 = vmatpush1.msra.mxu0 0.0
        %395 = vmatprep.subr.mxu0 0.0
        %396 = vmatpush1.msra.mxu0 0.0
        %397 = vmatprep.subr.mxu0 0.0
        %398 = vmatpush1.msra.mxu0 0.0
        %399 = vmatprep.subr.mxu0 0.0
        %400 = vmatpush1.msra.mxu0 0.0
        %401 = vmatprep.subr.mxu0 0.0
        %402 = vmatpush1.msra.mxu0 0.0
        %403 = vmatprep.subr.mxu0 0.0
        %404 = vmatpush1.msra.mxu0 0.0
        %405 = vmatprep.subr.mxu0 0.0
        %406 = vmatpush1.msra.mxu0 0.0
        %407 = vmatprep.subr.mxu0 0.0
        %408 = vmatpush1.msra.mxu0 0.0
        %409 = vmatprep.mubr.f32.mxu0 0.0
        %410 = vmatmul.mubr.f32.gmra.mrb[0].mxu0 %v343
        %v411 = vpop.f32.mrb[0].mxu0
        %v412 = vadd.f32 %v339, %v411
        %v413 = vpop.f32.mrb[0].mxu0
        %414 = vdwg.mxu0
        %v415 = vld [vmem:[%s324] sm:$0x1]
        %v417 = vlaneseq
        %v418 = vshrl.u32 %v417, 7
        %v419 = vsub.s32 0, %v418
        %v420 = vrot.slane %v415, %v419
        %422 = vmatprep.subr.mxu0 0.0
        %423 = vmatpush1.msra.mxu0 %v330
        %424 = vmatprep.subr.mxu0 0.0
        %425 = vmatpush1.msra.mxu0 %v331
        %426 = vmatprep.subr.mxu0 0.0
        %427 = vmatpush1.msra.mxu0 %v332
        %428 = vmatprep.subr.mxu0 0.0
        %429 = vmatpush1.msra.mxu0 %v333
        %430 = vmatprep.subr.mxu0 0.0
        %431 = vmatpush1.msra.mxu0 0.0
        %432 = vmatprep.subr.mxu0 0.0
        %433 = vmatpush1.msra.mxu0 0.0
        %434 = vmatprep.subr.mxu0 0.0
        %435 = vmatpush1.msra.mxu0 0.0
        %436 = vmatprep.subr.mxu0 0.0
        %437 = vmatpush1.msra.mxu0 0.0
        %438 = vmatprep.subr.mxu0 0.0
        %439 = vmatpush1.msra.mxu0 0.0
        %440 = vmatprep.subr.mxu0 0.0
        %441 = vmatpush1.msra.mxu0 0.0
        %442 = vmatprep.subr.mxu0 0.0
        %443 = vmatpush1.msra.mxu0 0.0
        %444 = vmatprep.subr.mxu0 0.0
        %445 = vmatpush1.msra.mxu0 0.0
        %446 = vmatprep.subr.mxu0 0.0
        %447 = vmatpush1.msra.mxu0 0.0
        %448 = vmatprep.subr.mxu0 0.0
        %449 = vmatpush1.msra.mxu0 0.0
        %450 = vmatprep.subr.mxu0 0.0
        %451 = vmatpush1.msra.mxu0 0.0
        %452 = vmatprep.subr.mxu0 0.0
        %453 = vmatpush1.msra.mxu0 0.0
        %454 = vmatprep.subr.mxu0 0.0
        %455 = vmatpush1.msra.mxu0 0.0
        %456 = vmatprep.subr.mxu0 0.0
        %457 = vmatpush1.msra.mxu0 0.0
        %458 = vmatprep.subr.mxu0 0.0
        %459 = vmatpush1.msra.mxu0 0.0
        %460 = vmatprep.subr.mxu0 0.0
        %461 = vmatpush1.msra.mxu0 0.0
        %462 = vmatprep.subr.mxu0 0.0
        %463 = vmatpush1.msra.mxu0 0.0
        %464 = vmatprep.subr.mxu0 0.0
        %465 = vmatpush1.msra.mxu0 0.0
        %466 = vmatprep.subr.mxu0 0.0
        %467 = vmatpush1.msra.mxu0 0.0
        %468 = vmatprep.subr.mxu0 0.0
        %469 = vmatpush1.msra.mxu0 0.0
        %470 = vmatprep.subr.mxu0 0.0
        %471 = vmatpush1.msra.mxu0 0.0
        %472 = vmatprep.subr.mxu0 0.0
        %473 = vmatpush1.msra.mxu0 0.0
        %474 = vmatprep.subr.mxu0 0.0
        %475 = vmatpush1.msra.mxu0 0.0
        %476 = vmatprep.subr.mxu0 0.0
        %477 = vmatpush1.msra.mxu0 0.0
        %478 = vmatprep.subr.mxu0 0.0
        %479 = vmatpush1.msra.mxu0 0.0
        %480 = vmatprep.subr.mxu0 0.0
        %481 = vmatpush1.msra.mxu0 0.0
        %482 = vmatprep.subr.mxu0 0.0
        %483 = vmatpush1.msra.mxu0 0.0
        %484 = vmatprep.subr.mxu0 0.0
        %485 = vmatpush1.msra.mxu0 0.0
        %486 = vmatprep.mubr.f32.mxu0 0.0
        %487 = vmatmul.mubr.f32.gmra.mrb[0].mxu0 %v343
        %v488 = vpop.f32.mrb[0].mxu0
        %v489 = vadd.f32 %v420, %v488
        %v490 = vpop.f32.mrb[0].mxu0
        %491 = vdwg.mxu0
        %v492 = vmul.f32 %v489, 0.5
        %v493 = vmul.f32 %v489, 0.70710677
        %v494 = verf.f32.pop %v493
        %v495 = vadd.f32 %v494, 1.0
        %v496 = vmul.f32 %v492, %v495
        %v497 = vmul.f32 %v412, %v496
        %498 = vst [vmem:[%s318] sm:$0xff] %v497
        %s499 = sand.u32 %s175, 1
        %s500 = scalar_lea.sflag [#allocation4], %s499
        %s501 = sand.u32 %s175, 1
        %s502 = smul.addr %s501, 8
        %s503 = scalar_lea.vmem [#allocation8], %s502
        // Predicated region
        $region53: #{tpu_custom_call.1} parent=39 // pred_check
          %p504 = pneg %p185
        $region54: #{tpu_custom_call.1} parent=39 // pred_check_branch
          %506 = sbr.rel (%p504) target = $region56
        $region55: #{tpu_custom_call.1} parent=39 // pred_region
          %s508 = ssub.s32 128, 128
          %509 = vsyncadd %s500, %s508
          %s510 = sadd.s32 %s27, %s28
          %s511 = smul.addr %s510, 128
          %s512 = scalar_lea.hbm %s5, %s511
          %s514 = sshll.u32 %s503, 4
          %s515 = int_to_ptr.vmem [resolvable:$true] %s514
          %517 = dma.vmem_to_hbm [thread:$0]  %s515, 128, %s512, %s500
        $region56: #{tpu_custom_call.1} parent=39 // pred_fallthru
          _
      $region40: #{tpu_custom_call.1} parent=5 // pred_fallthru
        _
      %p518 = scmp.le.s32.totalorder 2, %s18
      // Predicated region
      $region57: #{tpu_custom_call.1} parent=5 // pred_check
        %p519 = pneg %p518
      $region58: #{tpu_custom_call.1} parent=5 // pred_check_branch
        %521 = sbr.rel (%p519) target = $region60
      $region59: #{tpu_custom_call.1} parent=5 // pred_region
        %s522 = ssub.s32 %s18, 2
        // Predicated region
        $region61: #{tpu_custom_call.1} parent=59 // pred_check
          %p523 = pneg %p191
        $region62: #{tpu_custom_call.1} parent=59 // pred_check_branch
          %525 = sbr.rel (%p523) target = $region64
        $region63: #{tpu_custom_call.1} parent=59 // pred_region
          %s526 = sand.u32 %s176, 1
          %s527 = scalar_lea.sflag [#allocation4], %s526
          %s528 = sand.u32 %s176, 1
          %s529 = smul.addr %s528, 8
          %s530 = scalar_lea.vmem [#allocation8], %s529
          %531 = dma.done %s527, 128
        $region64: #{tpu_custom_call.1} parent=59 // pred_fallthru
          _
      $region60: #{tpu_custom_call.1} parent=5 // pred_fallthru
        _
    $region6: #{tpu_custom_call.1} parent=1 // loop_footer
      %s22 = sadd.s32 1, %s18
    $region7: #{tpu_custom_call.1} parent=1 // loop_footer_branch
      %17 = sbr.rel target = $region3
    $region8: #{tpu_custom_call.1} parent=1 // loop_exit
      _
    %532 = vsyncpa [#allocation3], 1
    %s533 = scalar_lea.sflag [#allocation3], 1
    %534 = vsyncpa %s533, 1
    %535 = vsyncpa [#allocation6], 1
    %536 = vsyncpa [#allocation4], 1
    %s537 = scalar_lea.sflag [#allocation4], 1
    %538 = vsyncpa %s537, 1

// kernel: tpu_custom_call.1
$region0: #{tpu_custom_call.1}
  #allocation0 [shape = 'u32[]', space=smem, size = 0x4, offset = 0x4, fixed_abs, tag = 'smem constant byte address 0x4 - core index']
  #allocation1 [shape = 'u32[144,128]{1,0:T(1,128)}', space=vmem, size = 0x12000, scoped, tag = 'internal scratch']
  %s0 = inlined_call_operand.hbm [shape: f32[16,32], index: 0, kind: input, shape index: {}]
  %s1 = inlined_call_operand.hbm [shape: f32[32,128], index: 1, kind: input, shape index: {}]
  %s2 = inlined_call_operand.hbm [shape: f32[32,128], index: 2, kind: input, shape index: {}]
  %s3 = inlined_call_operand.vmem [shape: f32[1,128], index: 3, kind: input, shape index: {}]
  %s4 = inlined_call_operand.vmem [shape: f32[1,128], index: 4, kind: input, shape index: {}]
  %s5 = inlined_call_operand.hbm [shape: f32[16,128], index: 5, kind: output, shape index: {}]
  %s6 = sld [smem:[#allocation0]]
  $region65: #{tpu_custom_call.1} parent=0
    _
  %s8 = ssub.s32 1, %s6
  %s9 = scalar_select 0, %s8, %s6
  $region1: #{tpu_custom_call.1} parent=0
    #allocation2 [shape = 'u8[8192]{0}', space=vmem, size = 0x2000, scoped, tag = 'input window, operand 0']
    #allocation3 [shape = 's32[2]{0}', space=sflag, size = 0x8, scoped, tag = 'scoped memory for tpu_custom_call.1']
    #allocation4 [shape = 's32[2]{0}', space=sflag, size = 0x8, scoped, tag = 'scoped memory for tpu_custom_call.1']
    #allocation5 [shape = 'u8[16384]{0}', space=vmem, size = 0x4000, scoped, tag = 'input window, operand 1, single buffered']
    #allocation6 [shape = 's32[1]{0}', space=sflag, size = 0x4, scoped, tag = 'scoped memory for tpu_custom_call.1']
    #allocation7 [shape = 'u8[16384]{0}', space=vmem, size = 0x4000, scoped, tag = 'input window, operand 2, single buffered']
    #allocation8 [shape = 'u8[8192]{0}', space=vmem, size = 0x2000, scoped, tag = 'output window, operand 0']
    %10 = vsyncpa [#allocation3], 0
    %s11 = scalar_lea.sflag [#allocation3], 1
    %12 = vsyncpa %s11, 0
    %13 = vsyncpa [#allocation6], 0
    %14 = vsyncpa [#allocation4], 0
    %s15 = scalar_lea.sflag [#allocation4], 1
    %16 = vsyncpa %s15, 0
    loop: start=0, step=1, limit=4
    $region2: #{tpu_custom_call.1} parent=1 // loop_pre_header
      _
    $region3: #{tpu_custom_call.1} parent=1 // loop_header
      %s18 = sphi 0, %s22
      %p19 = scmp.ge.s32.totalorder %s18, 4
      %s25 = sphi 0, %s37
      %s26 = sphi 0, %s33
      %s27 = sphi 0, %s25
      %s28 = sphi 0, %s26
      %s29 = sphi 0, %s27
      %s30 = sphi 0, %s28
      %s40 = sphi 0, %s42
      %s43 = sphi 0, %s40
      %s44 = sphi 0, %s43
      %s60 = sphi 0, %s44
      %s66 = sphi 0, %s68
      %s69 = sphi 0, %s66
      %s70 = sphi 0, %s69
      %s86 = sphi 0, %s70
      %s92 = sphi 0, %s94
      %s95 = sphi 0, %s92
      %s96 = sphi 0, %s95
      %s112 = sphi 0, %s96
      %s118 = sphi 0, %s120
      %s121 = sphi 0, %s118
      %s122 = sphi 0, %s121
      %s138 = sphi 0, %s122
      %s144 = sphi 0, %s146
      %s147 = sphi 0, %s144
      %s148 = sphi 0, %s147
      %s164 = sphi 0, %s148
      %s172 = sphi 0, %s174
      %s175 = sphi 0, %s172
      %s176 = sphi 0, %s175
      %s192 = sphi 0, %s176
    $region4: #{tpu_custom_call.1} parent=1 // loop_header_branch
      %21 = sbr.rel (%p19) target = $region8
    $region5: #{tpu_custom_call.1} parent=1 // loop_body
      %s23 = ssub.s32 %s18, 1
      %s24 = ssub.s32 %s18, 2
      %s31 = sadd.s32 1, %s26
      %p32 = scmp.ge.s32.totalorder %s31, 2
      %s33 = scalar_select %p32, 0, %s31
      %s34 = sadd.s32 1, %s25
      %s35 = scalar_select %p32, %s34, %s25
      %p36 = scmp.ge.s32.totalorder %s35, 1
      %s37 = scalar_select %p36, 0, %s35
      %s38 = ssub.s32 %s26, %s33
      %p39 = scmp.eq.s32.totalorder %s38, 0
      %s41 = sadd.s32 %s40, 1
      %s42 = scalar_select %p39, %s40, %s41
      %p45 = pneg %p39
      %p46 = scmp.eq.s32.totalorder %s18, 1
      %p47 = por %p45, %p46
      %p48 = scmp.ne.s32.totalorder %s40, %s43
      %p49 = scmp.eq.s32.totalorder %s18, 0
      %p50 = por %p48, %p49
      %p51 = scmp.ne.s32.totalorder %s40, %s43
      %p52 = scmp.eq.s32.totalorder %s23, 1
      %p53 = por %p51, %p52
      %p54 = scmp.ne.s32.totalorder %s43, %s44
      %p55 = scmp.eq.s32.totalorder %s23, 0
      %p56 = por %p54, %p55
      %p57 = scmp.ne.s32.totalorder %s43, %s44
      %p58 = scmp.eq.s32.totalorder %s24, 1
      %p59 = por %p57, %p58
      %p61 = scmp.ne.s32.totalorder %s44, %s60
      %p62 = scmp.eq.s32.totalorder %s24, 0
      %p63 = por %p61, %p62
      %s64 = ssub.s32 %s25, %s37
      %p65 = scmp.eq.s32.totalorder %s64, 0
      %s67 = sadd.s32 %s66, 1
      %s68 = scalar_select %p65, %s66, %s67
      %p71 = pneg %p65
      %p72 = scmp.eq.s32.totalorder %s18, 1
      %p73 = por %p71, %p72
      %p74 = scmp.ne.s32.totalorder %s66, %s69
      %p75 = scmp.eq.s32.totalorder %s18, 0
      %p76 = por %p74, %p75
      %p77 = scmp.ne.s32.totalorder %s66, %s69
      %p78 = scmp.eq.s32.totalorder %s23, 1
      %p79 = por %p77, %p78
      %p80 = scmp.ne.s32.totalorder %s69, %s70
      %p81 = scmp.eq.s32.totalorder %s23, 0
      %p82 = por %p80, %p81
      %p83 = scmp.ne.s32.totalorder %s69, %s70
      %p84 = scmp.eq.s32.totalorder %s24, 1
      %p85 = por %p83, %p84
      %p87 = scmp.ne.s32.totalorder %s70, %s86
      %p88 = scmp.eq.s32.totalorder %s24, 0
      %p89 = por %p87, %p88
      %s90 = ssub.s32 %s25, %s37
      %p91 = scmp.eq.s32.totalorder %s90, 0
      %s93 = sadd.s32 %s92, 1
      %s94 = scalar_select %p91, %s92, %s93
      %p97 = pneg %p91
      %p98 = scmp.eq.s32.totalorder %s18, 1
      %p99 = por %p97, %p98
      %p100 = scmp.ne.s32.totalorder %s92, %s95
      %p101 = scmp.eq.s32.totalorder %s18, 0
      %p102 = por %p100, %p101
      %p103 = scmp.ne.s32.totalorder %s92, %s95
      %p104 = scmp.eq.s32.totalorder %s23, 1
      %p105 = por %p103, %p104
      %p106 = scmp.ne.s32.totalorder %s95, %s96
      %p107 = scmp.eq.s32.totalorder %s23, 0
      %p108 = por %p106, %p107
      %p109 = scmp.ne.s32.totalorder %s95, %s96
      %p110 = scmp.eq.s32.totalorder %s24, 1
      %p111 = por %p109, %p110
      %p113 = scmp.ne.s32.totalorder %s96, %s112
      %p114 = scmp.eq.s32.totalorder %s24, 0
      %p115 = por %p113, %p114
      %s116 = ssub.s32 %s25, %s37
      %p117 = scmp.eq.s32.totalorder %s116, 0
      %s119 = sadd.s32 %s118, 1
      %s120 = scalar_select %p117, %s118, %s119
      %p123 = pneg %p117
      %p124 = scmp.eq.s32.totalorder %s18, 1
      %p125 = por %p123, %p124
      %p126 = scmp.ne.s32.totalorder %s118, %s121
      %p127 = scmp.eq.s32.totalorder %s18, 0
      %p128 = por %p126, %p127
      %p129 = scmp.ne.s32.totalorder %s118, %s121
      %p130 = scmp.eq.s32.totalorder %s23, 1
      %p131 = por %p129, %p130
      %p132 = scmp.ne.s32.totalorder %s121, %s122
      %p133 = scmp.eq.s32.totalorder %s23, 0
      %p134 = por %p132, %p133
      %p135 = scmp.ne.s32.totalorder %s121, %s122
      %p136 = scmp.eq.s32.totalorder %s24, 1
      %p137 = por %p135, %p136
      %p139 = scmp.ne.s32.totalorder %s122, %s138
      %p140 = scmp.eq.s32.totalorder %s24, 0
      %p141 = por %p139, %p140
      %s142 = ssub.s32 %s25, %s37
      %p143 = scmp.eq.s32.totalorder %s142, 0
      %s145 = sadd.s32 %s144, 1
      %s146 = scalar_select %p143, %s144, %s145
      %p149 = pneg %p143
      %p150 = scmp.eq.s32.totalorder %s18, 1
      %p151 = por %p149, %p150
      %p152 = scmp.ne.s32.totalorder %s144, %s147
      %p153 = scmp.eq.s32.totalorder %s18, 0
      %p154 = por %p152, %p153
      %p155 = scmp.ne.s32.totalorder %s144, %s147
      %p156 = scmp.eq.s32.totalorder %s23, 1
      %p157 = por %p155, %p156
      %p158 = scmp.ne.s32.totalorder %s147, %s148
      %p159 = scmp.eq.s32.totalorder %s23, 0
      %p160 = por %p158, %p159
      %p161 = scmp.ne.s32.totalorder %s147, %s148
      %p162 = scmp.eq.s32.totalorder %s24, 1
      %p163 = por %p161, %p162
      %p165 = scmp.ne.s32.totalorder %s148, %s164
      %p166 = scmp.eq.s32.totalorder %s24, 0
      %p167 = por %p165, %p166
      %s168 = ssub.s32 %s26, %s33
      %s169 = ssub.s32 %s25, %s37
      %s170 = sor.u32 %s168, %s169
      %p171 = scmp.eq.s32.totalorder %s170, 0
      %s173 = sadd.s32 %s172, 1
      %s174 = scalar_select %p171, %s172, %s173
      %p177 = pneg %p171
      %p178 = scmp.eq.s32.totalorder %s18, 1
      %p179 = por %p177, %p178
      %p180 = scmp.ne.s32.totalorder %s172, %s175
      %p181 = scmp.eq.s32.totalorder %s18, 0
      %p182 = por %p180, %p181
      %p183 = scmp.ne.s32.totalorder %s172, %s175
      %p184 = scmp.eq.s32.totalorder %s23, 1
      %p185 = por %p183, %p184
      %p186 = scmp.ne.s32.totalorder %s175, %s176
      %p187 = scmp.eq.s32.totalorder %s23, 0
      %p188 = por %p186, %p187
      %p189 = scmp.ne.s32.totalorder %s175, %s176
      %p190 = scmp.eq.s32.totalorder %s24, 1
      %p191 = por %p189, %p190
      %p193 = scmp.ne.s32.totalorder %s176, %s192
      %p194 = scmp.eq.s32.totalorder %s24, 0
      %p195 = por %p193, %p194
      %p196 = scmp.le.s32.totalorder 1, %s18
      %p197 = scmp.lt.s32.totalorder %s18, 3
      %p198 = pnand %p196, %p197
      %p199 = pneg %p198
      // Predicated region
      $region9: #{tpu_custom_call.1} parent=5 // pred_check
        _
      $region10: #{tpu_custom_call.1} parent=5 // pred_check_branch
        %201 = sbr.rel (%p198) target = $region12
      $region11: #{tpu_custom_call.1} parent=5 // pred_region
        %s202 = ssub.s32 %s18, 1
        // Predicated region
        $region13: #{tpu_custom_call.1} parent=11 // pred_check
          %p203 = pneg %p82
        $region14: #{tpu_custom_call.1} parent=11 // pred_check_branch
          %205 = sbr.rel (%p203) target = $region16
        $region15: #{tpu_custom_call.1} parent=11 // pred_region
          %s207 = ssub.s32 512, 512
          %208 = vsyncadd [#allocation6], %s207
          %s209 = smul.addr %s27, 128
          %s210 = scalar_lea.hbm %s1, %s209
          %s211 = sshll.u32 [#allocation5], 4
          %s212 = int_to_ptr.vmem [resolvable:$true] %s211
          %217 = dma.hbm_to_vmem [thread:$0]  %s210, 512, %s212, [#allocation6], 128, 128, 8
        $region16: #{tpu_custom_call.1} parent=11 // pred_fallthru
          _
        // Predicated region
        $region17: #{tpu_custom_call.1} parent=11 // pred_check
          %p218 = pneg %p108
        $region18: #{tpu_custom_call.1} parent=11 // pred_check_branch
          %220 = sbr.rel (%p218) target = $region20
        $region19: #{tpu_custom_call.1} parent=11 // pred_region
          %s222 = ssub.s32 512, 512
          %223 = vsyncadd [#allocation6], %s222
          %s224 = smul.addr %s27, 128
          %s225 = scalar_lea.hbm %s2, %s224
          %s226 = sshll.u32 [#allocation7], 4
          %s227 = int_to_ptr.vmem [resolvable:$true] %s226
          %232 = dma.hbm_to_vmem [thread:$0]  %s225, 512, %s227, [#allocation6], 128, 128, 8
        $region20: #{tpu_custom_call.1} parent=11 // pred_fallthru
          _
        // Predicated region
        $region21: #{tpu_custom_call.1} parent=11 // pred_check
          %p233 = pneg %p134
        $region22: #{tpu_custom_call.1} parent=11 // pred_check_branch
          %235 = sbr.rel (%p233) target = $region24
        $region23: #{tpu_custom_call.1} parent=11 // pred_region
          %p236 = scmp.lt.s32.totalorder %s27, 0
          %s237 = scalar_select %p236, %s27, 0
          %s238 = scalar_lea.vmem %s3, %s237
        $region24: #{tpu_custom_call.1} parent=11 // pred_fallthru
          _
        // Predicated region
        $region25: #{tpu_custom_call.1} parent=11 // pred_check
          %p239 = pneg %p160
        $region26: #{tpu_custom_call.1} parent=11 // pred_check_branch
          %241 = sbr.rel (%p239) target = $region28
        $region27: #{tpu_custom_call.1} parent=11 // pred_region
          %p242 = scmp.lt.s32.totalorder %s27, 0
          %s243 = scalar_select %p242, %s27, 0
          %s244 = scalar_lea.vmem %s4, %s243
        $region28: #{tpu_custom_call.1} parent=11 // pred_fallthru
          _
      $region12: #{tpu_custom_call.1} parent=5 // pred_fallthru
        _
      %p245 = scmp.lt.s32.totalorder %s18, 2
      // Predicated region
      $region29: #{tpu_custom_call.1} parent=5 // pred_check
        %p246 = pneg %p245
      $region30: #{tpu_custom_call.1} parent=5 // pred_check_branch
        %248 = sbr.rel (%p246) target = $region32
      $region31: #{tpu_custom_call.1} parent=5 // pred_region
        // Predicated region
        $region33: #{tpu_custom_call.1} parent=31 // pred_check
          %p249 = pneg %p50
        $region34: #{tpu_custom_call.1} parent=31 // pred_check_branch
          %251 = sbr.rel (%p249) target = $region36
        $region35: #{tpu_custom_call.1} parent=31 // pred_region
          %s252 = sand.u32 %s40, 1
          %s253 = scalar_lea.sflag [#allocation3], %s252
          %s254 = sand.u32 %s40, 1
          %s255 = smul.addr %s254, 8
          %s256 = scalar_lea.vmem [#allocation2], %s255
          %s258 = ssub.s32 128, 128
          %259 = vsyncadd %s253, %s258
          %s260 = smul.addr %s26, 128
          %s261 = scalar_lea.hbm %s0, %s260
          %s263 = sshll.u32 %s256, 4
          %s264 = int_to_ptr.vmem [resolvable:$true] %s263
          %266 = dma.hbm_to_vmem [thread:$0]  %s261, 128, %s264, %s253
        $region36: #{tpu_custom_call.1} parent=31 // pred_fallthru
          _
      $region32: #{tpu_custom_call.1} parent=5 // pred_fallthru
        _
      %p267 = scmp.le.s32.totalorder 1, %s18
      %p268 = scmp.lt.s32.totalorder %s18, 3
      %p269 = pnand %p267, %p268
      %p270 = pneg %p269
      // Predicated region
      $region37: #{tpu_custom_call.1} parent=5 // pred_check
        _
      $region38: #{tpu_custom_call.1} parent=5 // pred_check_branch
        %272 = sbr.rel (%p269) target = $region40
      $region39: #{tpu_custom_call.1} parent=5 // pred_region
        %s273 = ssub.s32 %s18, 1
        %s274 = sand.u32 %s43, 1
        %s275 = scalar_lea.sflag [#allocation3], %s274
        %s276 = sand.u32 %s43, 1
        %s277 = smul.addr %s276, 8
        %s278 = scalar_lea.vmem [#allocation2], %s277
        // Predicated region
        $region41: #{tpu_custom_call.1} parent=39 // pred_check
          %p279 = pneg %p56
        $region42: #{tpu_custom_call.1} parent=39 // pred_check_branch
          %281 = sbr.rel (%p279) target = $region44
        $region43: #{tpu_custom_call.1} parent=39 // pred_region
          %282 = dma.done %s275, 128
        $region44: #{tpu_custom_call.1} parent=39 // pred_fallthru
          _
        // Predicated region
        $region45: #{tpu_custom_call.1} parent=39 // pred_check
          %p283 = pneg %p82
        $region46: #{tpu_custom_call.1} parent=39 // pred_check_branch
          %285 = sbr.rel (%p283) target = $region48
        $region47: #{tpu_custom_call.1} parent=39 // pred_region
          %286 = dma.done [#allocation6], 512
        $region48: #{tpu_custom_call.1} parent=39 // pred_fallthru
          _
        // Predicated region
        $region49: #{tpu_custom_call.1} parent=39 // pred_check
          %p287 = pneg %p108
        $region50: #{tpu_custom_call.1} parent=39 // pred_check_branch
          %289 = sbr.rel (%p287) target = $region52
        $region51: #{tpu_custom_call.1} parent=39 // pred_region
          %290 = dma.done [#allocation6], 512
        $region52: #{tpu_custom_call.1} parent=39 // pred_fallthru
          _
        %s291 = sand.u32 %s43, 1
        %s292 = scalar_lea.sflag [#allocation3], %s291
        %s293 = sand.u32 %s43, 1
        %s294 = smul.addr %s293, 8
        %s295 = scalar_lea.vmem [#allocation2], %s294
        %p296 = pneg %p56
        %p297 = pneg %p53
        %p298 = pneg %p82
        %p299 = pneg %p79
        %p300 = pneg %p108
        %p301 = pneg %p105
        %p302 = scmp.lt.s32.totalorder %s27, 0
        %s303 = scalar_select %p302, %s27, 0
        %s304 = scalar_lea.vmem %s3, %s303
        %p305 = pneg %p134
        %p306 = pneg %p131
        %p307 = scmp.lt.s32.totalorder %s27, 0
        %s308 = scalar_select %p307, %s27, 0
        %s309 = scalar_lea.vmem %s4, %s308
        %p310 = pneg %p160
        %p311 = pneg %p157
        %p312 = pneg %p188
        %p313 = pneg %p185
        %s314 = sand.u32 %s175, 1
        %s315 = scalar_lea.sflag [#allocation4], %s314
        %s316 = sand.u32 %s175, 1
        %s317 = smul.addr %s316, 8
        %s318 = scalar_lea.vmem [#allocation8], %s317
        %p319 = scmp.lt.s32.totalorder %s27, 0
        %s320 = scalar_select %p319, %s27, 0
        %s321 = scalar_lea.vmem %s3, %s320
        %p322 = scmp.lt.s32.totalorder %s27, 0
        %s323 = scalar_select %p322, %s27, 0
        %s324 = scalar_lea.vmem %s4, %s323
        %v325 = vld [vmem:[%s278] sm:$0xff]
        %v326 = vld [vmem:[#allocation5] sm:$0xff]
        %v327 = vld [vmem:[#allocation5 + $0x8] sm:$0xff]
        %v328 = vld [vmem:[#allocation5 + $0x10] sm:$0xff]
        %v329 = vld [vmem:[#allocation5 + $0x18] sm:$0xff]
        %v330 = vld [vmem:[#allocation7] sm:$0xff]
        %v331 = vld [vmem:[#allocation7 + $0x8] sm:$0xff]
        %v332 = vld [vmem:[#allocation7 + $0x10] sm:$0xff]
        %v333 = vld [vmem:[#allocation7 + $0x18] sm:$0xff]
        %v334 = vld [vmem:[%s321] sm:$0x1]
        %v336 = vlaneseq
        %v337 = vshrl.u32 %v336, 7
        %v338 = vsub.s32 0, %v337
        %v339 = vrot.slane %v334, %v338
        %vm341 = vcmask 261120
        %v343 = vsel %vm341, %v325, 0
        %345 = vmatprep.subr.mxu0 0.0
        %346 = vmatpush1.msra.mxu0 %v326
        %347 = vmatprep.subr.mxu0 0.0
        %348 = vmatpush1.msra.mxu0 %v327
        %349 = vmatprep.subr.mxu0 0.0
        %350 = vmatpush1.msra.mxu0 %v328
        %351 = vmatprep.subr.mxu0 0.0
        %352 = vmatpush1.msra.mxu0 %v329
        %353 = vmatprep.subr.mxu0 0.0
        %354 = vmatpush1.msra.mxu0 0.0
        %355 = vmatprep.subr.mxu0 0.0
        %356 = vmatpush1.msra.mxu0 0.0
        %357 = vmatprep.subr.mxu0 0.0
        %358 = vmatpush1.msra.mxu0 0.0
        %359 = vmatprep.subr.mxu0 0.0
        %360 = vmatpush1.msra.mxu0 0.0
        %361 = vmatprep.subr.mxu0 0.0
        %362 = vmatpush1.msra.mxu0 0.0
        %363 = vmatprep.subr.mxu0 0.0
        %364 = vmatpush1.msra.mxu0 0.0
        %365 = vmatprep.subr.mxu0 0.0
        %366 = vmatpush1.msra.mxu0 0.0
        %367 = vmatprep.subr.mxu0 0.0
        %368 = vmatpush1.msra.mxu0 0.0
        %369 = vmatprep.subr.mxu0 0.0
        %370 = vmatpush1.msra.mxu0 0.0
        %371 = vmatprep.subr.mxu0 0.0
        %372 = vmatpush1.msra.mxu0 0.0
        %373 = vmatprep.subr.mxu0 0.0
        %374 = vmatpush1.msra.mxu0 0.0
        %375 = vmatprep.subr.mxu0 0.0
        %376 = vmatpush1.msra.mxu0 0.0
        %377 = vmatprep.subr.mxu0 0.0
        %378 = vmatpush1.msra.mxu0 0.0
        %379 = vmatprep.subr.mxu0 0.0
        %380 = vmatpush1.msra.mxu0 0.0
        %381 = vmatprep.subr.mxu0 0.0
        %382 = vmatpush1.msra.mxu0 0.0
        %383 = vmatprep.subr.mxu0 0.0
        %384 = vmatpush1.msra.mxu0 0.0
        %385 = vmatprep.subr.mxu0 0.0
        %386 = vmatpush1.msra.mxu0 0.0
        %387 = vmatprep.subr.mxu0 0.0
        %388 = vmatpush1.msra.mxu0 0.0
        %389 = vmatprep.subr.mxu0 0.0
        %390 = vmatpush1.msra.mxu0 0.0
        %391 = vmatprep.subr.mxu0 0.0
        %392 = vmatpush1.msra.mxu0 0.0
        %393 = vmatprep.subr.mxu0 0.0
        %394 = vmatpush1.msra.mxu0 0.0
        %395 = vmatprep.subr.mxu0 0.0
        %396 = vmatpush1.msra.mxu0 0.0
        %397 = vmatprep.subr.mxu0 0.0
        %398 = vmatpush1.msra.mxu0 0.0
        %399 = vmatprep.subr.mxu0 0.0
        %400 = vmatpush1.msra.mxu0 0.0
        %401 = vmatprep.subr.mxu0 0.0
        %402 = vmatpush1.msra.mxu0 0.0
        %403 = vmatprep.subr.mxu0 0.0
        %404 = vmatpush1.msra.mxu0 0.0
        %405 = vmatprep.subr.mxu0 0.0
        %406 = vmatpush1.msra.mxu0 0.0
        %407 = vmatprep.subr.mxu0 0.0
        %408 = vmatpush1.msra.mxu0 0.0
        %409 = vmatprep.mubr.f32.mxu0 0.0
        %410 = vmatmul.mubr.f32.gmra.mrb[0].mxu0 %v343
        %v411 = vpop.f32.mrb[0].mxu0
        %v412 = vadd.f32 %v339, %v411
        %v413 = vpop.f32.mrb[0].mxu0
        %414 = vdwg.mxu0
        %v415 = vld [vmem:[%s324] sm:$0x1]
        %v417 = vlaneseq
        %v418 = vshrl.u32 %v417, 7
        %v419 = vsub.s32 0, %v418
        %v420 = vrot.slane %v415, %v419
        %422 = vmatprep.subr.mxu0 0.0
        %423 = vmatpush1.msra.mxu0 %v330
        %424 = vmatprep.subr.mxu0 0.0
        %425 = vmatpush1.msra.mxu0 %v331
        %426 = vmatprep.subr.mxu0 0.0
        %427 = vmatpush1.msra.mxu0 %v332
        %428 = vmatprep.subr.mxu0 0.0
        %429 = vmatpush1.msra.mxu0 %v333
        %430 = vmatprep.subr.mxu0 0.0
        %431 = vmatpush1.msra.mxu0 0.0
        %432 = vmatprep.subr.mxu0 0.0
        %433 = vmatpush1.msra.mxu0 0.0
        %434 = vmatprep.subr.mxu0 0.0
        %435 = vmatpush1.msra.mxu0 0.0
        %436 = vmatprep.subr.mxu0 0.0
        %437 = vmatpush1.msra.mxu0 0.0
        %438 = vmatprep.subr.mxu0 0.0
        %439 = vmatpush1.msra.mxu0 0.0
        %440 = vmatprep.subr.mxu0 0.0
        %441 = vmatpush1.msra.mxu0 0.0
        %442 = vmatprep.subr.mxu0 0.0
        %443 = vmatpush1.msra.mxu0 0.0
        %444 = vmatprep.subr.mxu0 0.0
        %445 = vmatpush1.msra.mxu0 0.0
        %446 = vmatprep.subr.mxu0 0.0
        %447 = vmatpush1.msra.mxu0 0.0
        %448 = vmatprep.subr.mxu0 0.0
        %449 = vmatpush1.msra.mxu0 0.0
        %450 = vmatprep.subr.mxu0 0.0
        %451 = vmatpush1.msra.mxu0 0.0
        %452 = vmatprep.subr.mxu0 0.0
        %453 = vmatpush1.msra.mxu0 0.0
        %454 = vmatprep.subr.mxu0 0.0
        %455 = vmatpush1.msra.mxu0 0.0
        %456 = vmatprep.subr.mxu0 0.0
        %457 = vmatpush1.msra.mxu0 0.0
        %458 = vmatprep.subr.mxu0 0.0
        %459 = vmatpush1.msra.mxu0 0.0
        %460 = vmatprep.subr.mxu0 0.0
        %461 = vmatpush1.msra.mxu0 0.0
        %462 = vmatprep.subr.mxu0 0.0
        %463 = vmatpush1.msra.mxu0 0.0
        %464 = vmatprep.subr.mxu0 0.0
        %465 = vmatpush1.msra.mxu0 0.0
        %466 = vmatprep.subr.mxu0 0.0
        %467 = vmatpush1.msra.mxu0 0.0
        %468 = vmatprep.subr.mxu0 0.0
        %469 = vmatpush1.msra.mxu0 0.0
        %470 = vmatprep.subr.mxu0 0.0
        %471 = vmatpush1.msra.mxu0 0.0
        %472 = vmatprep.subr.mxu0 0.0
        %473 = vmatpush1.msra.mxu0 0.0
        %474 = vmatprep.subr.mxu0 0.0
        %475 = vmatpush1.msra.mxu0 0.0
        %476 = vmatprep.subr.mxu0 0.0
        %477 = vmatpush1.msra.mxu0 0.0
        %478 = vmatprep.subr.mxu0 0.0
        %479 = vmatpush1.msra.mxu0 0.0
        %480 = vmatprep.subr.mxu0 0.0
        %481 = vmatpush1.msra.mxu0 0.0
        %482 = vmatprep.subr.mxu0 0.0
        %483 = vmatpush1.msra.mxu0 0.0
        %484 = vmatprep.subr.mxu0 0.0
        %485 = vmatpush1.msra.mxu0 0.0
        %486 = vmatprep.mubr.f32.mxu0 0.0
        %487 = vmatmul.mubr.f32.gmra.mrb[0].mxu0 %v343
        %v488 = vpop.f32.mrb[0].mxu0
        %v489 = vadd.f32 %v420, %v488
        %v490 = vpop.f32.mrb[0].mxu0
        %491 = vdwg.mxu0
        %v492 = vmul.f32 %v489, 0.5
        %v493 = vmul.f32 %v489, 0.70710677
        %v494 = verf.f32.pop %v493
        %v495 = vadd.f32 %v494, 1.0
        %v496 = vmul.f32 %v492, %v495
        %v497 = vmul.f32 %v412, %v496
        %498 = vst [vmem:[%s318] sm:$0xff] %v497
        %s499 = sand.u32 %s175, 1
        %s500 = scalar_lea.sflag [#allocation4], %s499
        %s501 = sand.u32 %s175, 1
        %s502 = smul.addr %s501, 8
        %s503 = scalar_lea.vmem [#allocation8], %s502
        // Predicated region
        $region53: #{tpu_custom_call.1} parent=39 // pred_check
          %p504 = pneg %p185
        $region54: #{tpu_custom_call.1} parent=39 // pred_check_branch
          %506 = sbr.rel (%p504) target = $region56
        $region55: #{tpu_custom_call.1} parent=39 // pred_region
          %s508 = ssub.s32 128, 128
          %509 = vsyncadd %s500, %s508
          %s510 = sadd.s32 %s27, %s28
          %s511 = smul.addr %s510, 128
          %s512 = scalar_lea.hbm %s5, %s511
          %s514 = sshll.u32 %s503, 4
          %s515 = int_to_ptr.vmem [resolvable:$true] %s514
          %517 = dma.vmem_to_hbm [thread:$0]  %s515, 128, %s512, %s500
        $region56: #{tpu_custom_call.1} parent=39 // pred_fallthru
          _
      $region40: #{tpu_custom_call.1} parent=5 // pred_fallthru
        _
      %p518 = scmp.le.s32.totalorder 2, %s18
      // Predicated region
      $region57: #{tpu_custom_call.1} parent=5 // pred_check
        %p519 = pneg %p518
      $region58: #{tpu_custom_call.1} parent=5 // pred_check_branch
        %521 = sbr.rel (%p519) target = $region60
      $region59: #{tpu_custom_call.1} parent=5 // pred_region
        %s522 = ssub.s32 %s18, 2
        // Predicated region
        $region61: #{tpu_custom_call.1} parent=59 // pred_check
          %p523 = pneg %p191
        $region62: #{tpu_custom_call.1} parent=59 // pred_check_branch
          %525 = sbr.rel (%p523) target = $region64
        $region63: #{tpu_custom_call.1} parent=59 // pred_region
          %s526 = sand.u32 %s176, 1
          %s527 = scalar_lea.sflag [#allocation4], %s526
          %s528 = sand.u32 %s176, 1
          %s529 = smul.addr %s528, 8
          %s530 = scalar_lea.vmem [#allocation8], %s529
          %531 = dma.done %s527, 128
        $region64: #{tpu_custom_call.1} parent=59 // pred_fallthru
          _
      $region60: #{tpu_custom_call.1} parent=5 // pred_fallthru
        _
    $region6: #{tpu_custom_call.1} parent=1 // loop_footer
      %s22 = sadd.s32 1, %s18
    $region7: #{tpu_custom_call.1} parent=1 // loop_footer_branch
      %17 = sbr.rel target = $region3
    $region8: #{tpu_custom_call.1} parent=1 // loop_exit
      _
    %532 = vsyncpa [#allocation3], 1
    %s533 = scalar_lea.sflag [#allocation3], 1
    %534 = vsyncpa %s533, 1
    %535 = vsyncpa [#allocation6], 1
    %536 = vsyncpa [#allocation4], 1
    %s537 = scalar_lea.sflag [#allocation4], 1
    %538 = vsyncpa %s537, 1

</llo_original>
